<compile_context>
chip_gen: v7x
topology: tpu7x:2x2x1
jax: 0.10.0
libtpu: 0.0.40
codegen_flags: <defaults>
</compile_context>

<pallas_src>
import jax
import jax.numpy as jnp
from jax.experimental import pallas as pl
from jax.experimental.pallas import tpu as pltpu

LANE = 128
SUBLANE = 8


def _round_up(n, m):
    return (n + m - 1) // m * m


def _make_mlp_kernel(n_layers):
    """Fused MLP kernel. Ref order: x, w0, b0, ..., w_{L-1}, b_{L-1}, out.

    Hidden layers: (TB, k) @ (k, n) + b  -> ReLU -> bf16.
    Last layer (width 1): weights stored transposed as (8, k) with row 0 real;
    computed as A @ B^T via dot_general -> (8, TB) f32; row 0 (+bias) is the
    lane-dense logit row stored to the (1, TB) output block.
    """

    def kernel(*refs):
        x_ref = refs[0]
        o_ref = refs[-1]
        params = refs[1:-1]

        h = x_ref[...].astype(jnp.bfloat16)               # (TB, in_dim) bf16
        for i in range(n_layers - 1):
            w = params[2 * i][...]                        # (k_p, n_p) bf16
            b = params[2 * i + 1][...]                    # (1, n_p)  f32
            acc = jnp.dot(h, w, preferred_element_type=jnp.float32) + b
            h = jnp.maximum(acc, 0.0).astype(jnp.bfloat16)   # ReLU in f32, bf16 for MXU

        w_t = params[2 * (n_layers - 1)][...]             # (8, k_p) bf16, row 0 real
        b_t = params[2 * (n_layers - 1) + 1][...]         # (8, 1)   f32 (all rows = bias)
        # out_slab[r, j] = sum_k w_t[r, k] * h[j, k]  (A @ B^T on the MXU, f32 accumulate)
        out_slab = jax.lax.dot_general(
            w_t, h,
            dimension_numbers=(((1,), (1,)), ((), ())),
            preferred_element_type=jnp.float32,
        ) + b_t                                           # (8, TB) f32
        o_ref[...] = out_slab[0:1, :].astype(o_ref.dtype)  # packed lane-dense (1, TB)

    return kernel


def prepare_params(weights, biases):
    """Pad + cast parameters ONCE (outside the per-call forward path).

    Hidden-layer output widths are zero-padded to multiples of 128 lanes (padded
    activation lanes stay exactly 0 through bias-add and ReLU, so numerics are
    unchanged).  The final width-1 layer is stored *transposed* as an (8, k) slab
    (row 0 = real weights, rows 1..7 zero) so the kernel can emit a lane-dense
    logit row directly.  Weights -> bf16 for the MXU; biases stay f32.
    """
    n = len(weights)
    ws, bs = [], []
    prev_p = weights[0].shape[0]  # input feature dim (left unpadded)
    for i, (w, b) in enumerate(zip(weights, biases)):
        w = jnp.asarray(w, jnp.float32)
        b = jnp.asarray(b, jnp.float32)
        din, dout = w.shape
        if i < n - 1:
            dout_p = _round_up(dout, LANE)
            wp = jnp.zeros((prev_p, dout_p), jnp.float32).at[:din, :dout].set(w)
            bp = jnp.zeros((1, dout_p), jnp.float32).at[0, :dout].set(b)
            ws.append(wp.astype(jnp.bfloat16))
            bs.append(bp)
            prev_p = dout_p
        else:
            assert dout == 1, "Discriminator trunk output width must be 1"
            wt = jnp.zeros((SUBLANE, prev_p), jnp.float32).at[0, :din].set(w[:, 0])
            ws.append(wt.astype(jnp.bfloat16))
            bs.append(jnp.full((SUBLANE, 1), b[0], dtype=jnp.float32))
    return ws, bs


def discriminator_forward(x, ws_padded, bs_padded, *, tb=1024):
    """Discriminator trunk (MLP -> logits) as one gridded Pallas kernel.

    x:          (B, input_dim) float32
    ws_padded:  bf16 weights from prepare_params (last layer transposed (8, k))
    bs_padded:  f32 biases from prepare_params
    returns:    (B, 1) float32 logits
    """
    B, in_dim = x.shape
    n_layers = len(ws_padded)

    # --- batch tile: multiple of 128 lanes (out block is lane-major), capped so the
    # --- grid has >= 2 steps whenever B >= 256 (both v7x TensorCores busy).
    b_ceil = _round_up(B, LANE)
    tb_cap = max(LANE, (int(tb) // LANE) * LANE)
    two_core = max(LANE, _round_up(-(-b_ceil // 2), LANE))
    tb_eff = min(tb_cap, b_ceil, two_core)
    grid = (pl.cdiv(B, tb_eff),)

    kernel = _make_mlp_kernel(n_layers)

    operands = [x]
    in_specs = [pl.BlockSpec((tb_eff, in_dim), lambda i: (i, 0))]
    for w, b in zip(ws_padded, bs_padded):
        operands.append(w)
        operands.append(b)
        # Full-shape blocks, constant index_map -> parameters stay VMEM-resident across
        # the whole batch grid (no re-DMA).
        # NOTE: could add pipeline_mode=pl.Buffered(1) here to drop the second param
        # buffer; left at the default for portability and budgeted for in vmem_limit.
        in_specs.append(pl.BlockSpec(w.shape, lambda i: (0, 0)))
        in_specs.append(pl.BlockSpec(b.shape, lambda i: (0, 0)))

    # Packed, lane-dense logit row: 4 B of HBM writeback per sample.
    out_spec = pl.BlockSpec((1, tb_eff), lambda i: (0, i))
    out_shape = jax.ShapeDtypeStruct((1, B), jnp.float32)

    # --- explicit VMEM budget (v7x has only 64 MiB physical VMEM) -------------------
    param_bytes = (sum(int(w.size) * 2 for w in ws_padded)
                   + sum(int(b.size) * 4 for b in bs_padded))
    widths = [in_dim] + [int(w.shape[1]) for w in ws_padded[:-1]] + [SUBLANE]
    need = (2 * param_bytes                    # params (double-buffered by default)
            + 2 * tb_eff * in_dim * 4          # x tile (f32), double-buffered
            + 2 * SUBLANE * tb_eff * 4         # out tile ((1,TB) f32, 8-sublane padded)
            + 3 * tb_eff * max(widths) * 4)    # activation working set
    vmem_limit = int(min(max(2 * need, 32 * 1024 * 1024), 64 * 1024 * 1024))
    # TODO(synk): fall back to a K/N-tiled weight grid if resident weights ever exceed
    # ~40 MiB (very wide/deep discriminators on v7x).

    flops = sum(2 * B * int(w.shape[0]) * int(w.shape[1]) for w in ws_padded)
    bytes_accessed = int(x.size) * 4 + B * 4 + param_bytes
    cost = pl.CostEstimate(flops=int(flops), transcendentals=0,
                           bytes_accessed=int(bytes_accessed))

    out_row = pl.pallas_call(
        kernel,
        out_shape=out_shape,
        grid=grid,
        in_specs=in_specs,
        out_specs=out_spec,
        compiler_params=pltpu.CompilerParams(
            dimension_semantics=("parallel",),
            vmem_limit_bytes=vmem_limit),
        cost_estimate=cost,
    )(*operands)

    return out_row.reshape(B, 1)


def init_params(key, input_dim, hidden_dim, hidden_depth):
    """Deterministic synthetic init matching utils.mlp's layer shapes."""
    if hidden_depth == 0:
        dims = [(input_dim, 1)]
    else:
        dims = [(input_dim, hidden_dim)]
        for _ in range(hidden_depth - 1):
            dims.append((hidden_dim, hidden_dim))
        dims.append((hidden_dim, 1))

    weights, biases = [], []
    for din, dout in dims:
        kw, kb, key = jax.random.split(key, 3)
        # utils.weight_init uses orthogonal init; any deterministic init is fine here.
        weights.append(jax.random.normal(kw, (din, dout), jnp.float32) * 0.1)
        biases.append(jnp.zeros((dout,), jnp.float32))
    return weights, biases


def reference_forward(x, weights, biases, *, bf16_inputs=False):
    h = x.astype(jnp.bfloat16).astype(jnp.float32) if bf16_inputs else x
    for i, (w, b) in enumerate(zip(weights, biases)):
        wc = w.astype(jnp.bfloat16).astype(jnp.float32) if bf16_inputs else w
        h = h @ wc + b
        if i < len(weights) - 1:
            h = jnp.maximum(h, 0.0)
        if bf16_inputs and i < len(weights) - 1:
            h = h.astype(jnp.bfloat16).astype(jnp.float32)
    return h


if __name__ == "__main__":
    key = jax.random.PRNGKey(0)
    kx, kp = jax.random.split(key)

    batch = 8
    input_dim = 32   # e.g. concat(obs, action) "transition" features
    hidden_dim = 32
    hidden_depth = 2

    x = jax.random.normal(kx, (batch, input_dim), jnp.float32)
    weights, biases = init_params(kp, input_dim, hidden_dim, hidden_depth)

    # Pad/cast once (hoisted out of the forward path).
    ws_p, bs_p = prepare_params(weights, biases)

    out = discriminator_forward(x, ws_p, bs_p)
    out = jax.block_until_ready(out)

    assert out.shape == (batch, 1), out.shape

    # Tight check against a reference mirroring the kernel's bf16-in / f32-acc math.
    ref_bf16 = reference_forward(x, weights, biases, bf16_inputs=True)
    assert jnp.allclose(out, ref_bf16, atol=1e-3, rtol=1e-3), (out, ref_bf16)

    # Loose check against the original full-f32 module semantics.
    ref_f32 = reference_forward(x, weights, biases)
    assert jnp.allclose(out, ref_f32, atol=3e-2, rtol=3e-2), (out, ref_f32)

    # TODO(synk): dist == 'binary' branch wraps logits in an Independent(Bernoulli)
    # distribution object; that is host-side API sugar, not kernel compute.
    print("KERNEL_OK")
</pallas_src>

<mosaic_0001>
module attributes {stable_mosaic.version = 11 : i64} {
  func.func @kernel(%arg0: i32, %arg1: memref<128x32xf32, #tpu.memory_space<vmem>>, %arg2: memref<32x128xbf16, #tpu.memory_space<vmem>>, %arg3: memref<1x128xf32, #tpu.memory_space<vmem>>, %arg4: memref<128x128xbf16, #tpu.memory_space<vmem>>, %arg5: memref<1x128xf32, #tpu.memory_space<vmem>>, %arg6: memref<8x128xbf16, #tpu.memory_space<vmem>>, %arg7: memref<8x1xf32, #tpu.memory_space<vmem>>, %arg8: memref<1x128xf32, #tpu.memory_space<vmem>>) attributes {dimension_semantics = [#tpu.dimension_semantics<parallel>], iteration_bounds = array<i64: 1>, scalar_prefetch = 0 : i64, scratch_operands = 0 : i64, tpu.core_type = #tpu.core_type<tc>, window_params = [{transform_indices = @transform_0, window_bounds = array<i64: 128, 32>}, {pipeline_mode = #tpu.pipeline_mode<synchronous>, transform_indices = @transform_1, window_bounds = array<i64: 32, 128>}, {pipeline_mode = #tpu.pipeline_mode<synchronous>, transform_indices = @transform_2, window_bounds = array<i64: 1, 128>}, {pipeline_mode = #tpu.pipeline_mode<synchronous>, transform_indices = @transform_3, window_bounds = array<i64: 128, 128>}, {pipeline_mode = #tpu.pipeline_mode<synchronous>, transform_indices = @transform_4, window_bounds = array<i64: 1, 128>}, {pipeline_mode = #tpu.pipeline_mode<synchronous>, transform_indices = @transform_5, window_bounds = array<i64: 8, 128>}, {pipeline_mode = #tpu.pipeline_mode<synchronous>, transform_indices = @transform_6, window_bounds = array<i64: 8, 1>}, {transform_indices = @transform_7, window_bounds = array<i64: 1, 128>}]} {
    %c0 = arith.constant 0 : index
    %c0_0 = arith.constant 0 : index
    %0 = vector.load %arg1[%c0, %c0_0] : memref<128x32xf32, #tpu.memory_space<vmem>>, vector<128x32xf32>
    %1 = arith.truncf %0 : vector<128x32xf32> to vector<128x32xbf16>
    %c0_1 = arith.constant 0 : index
    %c0_2 = arith.constant 0 : index
    %2 = vector.load %arg2[%c0_1, %c0_2] : memref<32x128xbf16, #tpu.memory_space<vmem>>, vector<32x128xbf16>
    %c0_3 = arith.constant 0 : index
    %c0_4 = arith.constant 0 : index
    %3 = vector.load %arg3[%c0_3, %c0_4] : memref<1x128xf32, #tpu.memory_space<vmem>>, vector<1x128xf32>
    %cst = arith.constant dense<0.000000e+00> : vector<128x128xf32>
    %4 = tpu.matmul %1, %2, %cst {dimension_numbers = #tpu.dot_dimension_numbers<[1], [0], [0], [1], [0, 0, 1, 1], [], []>} : vector<128x32xbf16>, vector<32x128xbf16>, vector<128x128xf32> -> vector<128x128xf32>
    %5 = vector.broadcast %3 : vector<1x128xf32> to vector<128x128xf32>
    %6 = arith.addf %4, %5 : vector<128x128xf32>
    %cst_5 = arith.constant 0.000000e+00 : f32
    %7 = vector.broadcast %cst_5 : f32 to vector<128x128xf32>
    %8 = arith.maximumf %6, %7 : vector<128x128xf32>
    %9 = arith.truncf %8 : vector<128x128xf32> to vector<128x128xbf16>
    %c0_6 = arith.constant 0 : index
    %c0_7 = arith.constant 0 : index
    %10 = vector.load %arg4[%c0_6, %c0_7] : memref<128x128xbf16, #tpu.memory_space<vmem>>, vector<128x128xbf16>
    %c0_8 = arith.constant 0 : index
    %c0_9 = arith.constant 0 : index
    %11 = vector.load %arg5[%c0_8, %c0_9] : memref<1x128xf32, #tpu.memory_space<vmem>>, vector<1x128xf32>
    %cst_10 = arith.constant dense<0.000000e+00> : vector<128x128xf32>
    %12 = tpu.matmul %9, %10, %cst_10 {dimension_numbers = #tpu.dot_dimension_numbers<[1], [0], [0], [1], [0, 0, 1, 1], [], []>} : vector<128x128xbf16>, vector<128x128xbf16>, vector<128x128xf32> -> vector<128x128xf32>
    %13 = vector.broadcast %11 : vector<1x128xf32> to vector<128x128xf32>
    %14 = arith.addf %12, %13 : vector<128x128xf32>
    %cst_11 = arith.constant 0.000000e+00 : f32
    %15 = vector.broadcast %cst_11 : f32 to vector<128x128xf32>
    %16 = arith.maximumf %14, %15 : vector<128x128xf32>
    %17 = arith.truncf %16 : vector<128x128xf32> to vector<128x128xbf16>
    %c0_12 = arith.constant 0 : index
    %c0_13 = arith.constant 0 : index
    %18 = vector.load %arg6[%c0_12, %c0_13] : memref<8x128xbf16, #tpu.memory_space<vmem>>, vector<8x128xbf16>
    %c0_14 = arith.constant 0 : index
    %c0_15 = arith.constant 0 : index
    %19 = vector.load %arg7[%c0_14, %c0_15] : memref<8x1xf32, #tpu.memory_space<vmem>>, vector<8x1xf32>
    %cst_16 = arith.constant dense<0.000000e+00> : vector<8x128xf32>
    %20 = tpu.matmul %18, %17, %cst_16 {dimension_numbers = #tpu.dot_dimension_numbers<[1], [1], [0], [0], [0, 0, 1, 0], [], []>} : vector<8x128xbf16>, vector<128x128xbf16>, vector<8x128xf32> -> vector<8x128xf32>
    %21 = vector.broadcast %19 : vector<8x1xf32> to vector<8x128xf32>
    %22 = arith.addf %20, %21 : vector<8x128xf32>
    %23 = vector.extract_strided_slice %22 {offsets = [0, 0], sizes = [1, 128], strides = [1, 1]} : vector<8x128xf32> to vector<1x128xf32>
    %c0_17 = arith.constant 0 : index
    %c0_18 = arith.constant 0 : index
    %24 = vector.load %arg8[%c0_17, %c0_18] : memref<1x128xf32, #tpu.memory_space<vmem>>, vector<1x128xf32>
    tpu.vector_store %arg8[%c0_17, %c0_18], %23 {strides = array<i32>} : memref<1x128xf32, #tpu.memory_space<vmem>>, vector<1x128xf32>,
    return
  }
  func.func @transform_0(%arg0: i32) -> (i32, i32) {
    %c0_i32 = arith.constant 0 : i32
    %c0_i32_0 = arith.constant 0 : i32
    return %arg0, %c0_i32 : i32, i32
  }
  func.func @transform_1(%arg0: i32) -> (i32, i32) {
    %c0_i32 = arith.constant 0 : i32
    %c0_i32_0 = arith.constant 0 : i32
    %c0_i32_1 = arith.constant 0 : i32
    return %c0_i32, %c0_i32_0 : i32, i32
  }
  func.func @transform_2(%arg0: i32) -> (i32, i32) {
    %c0_i32 = arith.constant 0 : i32
    %c0_i32_0 = arith.constant 0 : i32
    %c0_i32_1 = arith.constant 0 : i32
    return %c0_i32, %c0_i32_0 : i32, i32
  }
  func.func @transform_3(%arg0: i32) -> (i32, i32) {
    %c0_i32 = arith.constant 0 : i32
    %c0_i32_0 = arith.constant 0 : i32
    %c0_i32_1 = arith.constant 0 : i32
    return %c0_i32, %c0_i32_0 : i32, i32
  }
  func.func @transform_4(%arg0: i32) -> (i32, i32) {
    %c0_i32 = arith.constant 0 : i32
    %c0_i32_0 = arith.constant 0 : i32
    %c0_i32_1 = arith.constant 0 : i32
    return %c0_i32, %c0_i32_0 : i32, i32
  }
  func.func @transform_5(%arg0: i32) -> (i32, i32) {
    %c0_i32 = arith.constant 0 : i32
    %c0_i32_0 = arith.constant 0 : i32
    %c0_i32_1 = arith.constant 0 : i32
    return %c0_i32, %c0_i32_0 : i32, i32
  }
  func.func @transform_6(%arg0: i32) -> (i32, i32) {
    %c0_i32 = arith.constant 0 : i32
    %c0_i32_0 = arith.constant 0 : i32
    %c0_i32_1 = arith.constant 0 : i32
    return %c0_i32, %c0_i32_0 : i32, i32
  }
  func.func @transform_7(%arg0: i32) -> (i32, i32) {
    %c0_i32 = arith.constant 0 : i32
    %c0_i32_0 = arith.constant 0 : i32
    return %c0_i32, %arg0 : i32, i32
  }
}

</mosaic_0001>

<llo_original>
// kernel: tpu_custom_call.1
$region0: #{tpu_custom_call.1}
  #allocation0 [shape = 'u32[]', space=smem, size = 0x4, offset = 0x4, fixed_abs, tag = 'smem constant byte address 0x4 - core index']
  #allocation1 [shape = 'u32[144,128]{1,0:T(1,128)}', space=vmem, size = 0x12000, scoped, tag = 'internal scratch']
  %s0 = inlined_call_operand.vmem [shape: f32[8,32], index: 0, kind: input, shape index: {}]
  %s1 = inlined_call_operand.hbm [shape: bf16[32,128], index: 1, kind: input, shape index: {}]
  %s2 = inlined_call_operand.vmem [shape: f32[1,128], index: 2, kind: input, shape index: {}]
  %s3 = inlined_call_operand.hbm [shape: bf16[128,128], index: 3, kind: input, shape index: {}]
  %s4 = inlined_call_operand.vmem [shape: f32[1,128], index: 4, kind: input, shape index: {}]
  %s5 = inlined_call_operand.vmem [shape: bf16[8,128], index: 5, kind: input, shape index: {}]
  %s6 = inlined_call_operand.vmem [shape: f32[8,1], index: 6, kind: input, shape index: {}]
  %s7 = inlined_call_operand.hbm [shape: f32[1,8], index: 7, kind: output, shape index: {}]
  %s8 = sld [smem:[#allocation0]]
  $region46: #{tpu_custom_call.1} parent=0
    _
  %s10 = ssub.s32 1, %s8
  %s11 = scalar_select 0, %s10, %s8
  $region1: #{tpu_custom_call.1} parent=0
    #allocation2 [shape = 'u8[8192]{0}', space=vmem, size = 0x2000, scoped, tag = 'input window, operand 1, single buffered']
    #allocation3 [shape = 's32[1]{0}', space=sflag, size = 0x4, scoped, tag = 'scoped memory for tpu_custom_call.1']
    #allocation4 [shape = 's32[1]{0}', space=sflag, size = 0x4, scoped, tag = 'scoped memory for tpu_custom_call.1']
    #allocation5 [shape = 'u8[32768]{0}', space=vmem, size = 0x8000, scoped, tag = 'input window, operand 3, single buffered']
    #allocation6 [shape = 's32[1]{0}', space=sflag, size = 0x4, scoped, tag = 'scoped memory for tpu_custom_call.1']
    #allocation7 [shape = 'u8[512]{0}', space=vmem, size = 0x400, scoped, tag = 'output window, operand 0, single buffered']
    %12 = vsyncpa [#allocation3], 0
    %13 = vsyncpa [#allocation6], 0
    %14 = vsyncpa [#allocation4], 0
    // Predicated region
    $region2: #{tpu_custom_call.1} parent=1 // pred_check
      _
    $region3: #{tpu_custom_call.1} parent=1 // pred_check_branch
      %16 = sbr.rel (0) target = $region5
    $region4: #{tpu_custom_call.1} parent=1 // pred_region
      _
    $region5: #{tpu_custom_call.1} parent=1 // pred_fallthru
      _
    // Predicated region
    $region6: #{tpu_custom_call.1} parent=1 // pred_check
      _
    $region7: #{tpu_custom_call.1} parent=1 // pred_check_branch
      %18 = sbr.rel (0) target = $region9
    $region8: #{tpu_custom_call.1} parent=1 // pred_region
      %s20 = ssub.s32 256, 256
      %21 = vsyncadd [#allocation3], %s20
      %s22 = sshll.u32 [#allocation2], 4
      %s23 = int_to_ptr.vmem [resolvable:$true] %s22
      %28 = dma.hbm_to_vmem [thread:$0]  %s1, 256, %s23, [#allocation3], 64, 64, 4
    $region9: #{tpu_custom_call.1} parent=1 // pred_fallthru
      _
    // Predicated region
    $region10: #{tpu_custom_call.1} parent=1 // pred_check
      _
    $region11: #{tpu_custom_call.1} parent=1 // pred_check_branch
      %30 = sbr.rel (0) target = $region13
    $region12: #{tpu_custom_call.1} parent=1 // pred_region
      _
    $region13: #{tpu_custom_call.1} parent=1 // pred_fallthru
      _
    // Predicated region
    $region14: #{tpu_custom_call.1} parent=1 // pred_check
      _
    $region15: #{tpu_custom_call.1} parent=1 // pred_check_branch
      %32 = sbr.rel (0) target = $region17
    $region16: #{tpu_custom_call.1} parent=1 // pred_region
      %s34 = ssub.s32 1024, 1024
      %35 = vsyncadd [#allocation6], %s34
      %s36 = sshll.u32 [#allocation5], 4
      %s37 = int_to_ptr.vmem [resolvable:$true] %s36
      %42 = dma.hbm_to_vmem [thread:$0]  %s3, 1024, %s37, [#allocation6], 64, 64, 4
    $region17: #{tpu_custom_call.1} parent=1 // pred_fallthru
      _
    // Predicated region
    $region18: #{tpu_custom_call.1} parent=1 // pred_check
      _
    $region19: #{tpu_custom_call.1} parent=1 // pred_check_branch
      %44 = sbr.rel (0) target = $region21
    $region20: #{tpu_custom_call.1} parent=1 // pred_region
      _
    $region21: #{tpu_custom_call.1} parent=1 // pred_fallthru
      _
    // Predicated region
    $region22: #{tpu_custom_call.1} parent=1 // pred_check
      _
    $region23: #{tpu_custom_call.1} parent=1 // pred_check_branch
      %46 = sbr.rel (0) target = $region25
    $region24: #{tpu_custom_call.1} parent=1 // pred_region
      _
    $region25: #{tpu_custom_call.1} parent=1 // pred_fallthru
      _
    // Predicated region
    $region26: #{tpu_custom_call.1} parent=1 // pred_check
      _
    $region27: #{tpu_custom_call.1} parent=1 // pred_check_branch
      %48 = sbr.rel (0) target = $region29
    $region28: #{tpu_custom_call.1} parent=1 // pred_region
      _
    $region29: #{tpu_custom_call.1} parent=1 // pred_fallthru
      _
    // Predicated region
    $region30: #{tpu_custom_call.1} parent=1 // pred_check
      _
    $region31: #{tpu_custom_call.1} parent=1 // pred_check_branch
      %50 = sbr.rel (0) target = $region33
    $region32: #{tpu_custom_call.1} parent=1 // pred_region
      %51 = dma.done [#allocation3], 256
    $region33: #{tpu_custom_call.1} parent=1 // pred_fallthru
      _
    // Predicated region
    $region34: #{tpu_custom_call.1} parent=1 // pred_check
      _
    $region35: #{tpu_custom_call.1} parent=1 // pred_check_branch
      %53 = sbr.rel (0) target = $region37
    $region36: #{tpu_custom_call.1} parent=1 // pred_region
      %54 = dma.done [#allocation6], 1024
    $region37: #{tpu_custom_call.1} parent=1 // pred_fallthru
      _
    %v56 = vld [vmem:[%s0] sm:$0xff]
    %v57 = vld [vmem:[%s0 + $0x8] sm:$0xff]
    %v58 = vld [vmem:[%s0 + $0x10] sm:$0xff]
    %v59 = vld [vmem:[%s0 + $0x18] sm:$0xff]
    %v60 = vld [vmem:[%s0 + $0x20] sm:$0xff]
    %v61 = vld [vmem:[%s0 + $0x28] sm:$0xff]
    %v62 = vld [vmem:[%s0 + $0x30] sm:$0xff]
    %v63 = vld [vmem:[%s0 + $0x38] sm:$0xff]
    %v64 = vld [vmem:[%s0 + $0x40] sm:$0xff]
    %v65 = vld [vmem:[%s0 + $0x48] sm:$0xff]
    %v66 = vld [vmem:[%s0 + $0x50] sm:$0xff]
    %v67 = vld [vmem:[%s0 + $0x58] sm:$0xff]
    %v68 = vld [vmem:[%s0 + $0x60] sm:$0xff]
    %v69 = vld [vmem:[%s0 + $0x68] sm:$0xff]
    %v70 = vld [vmem:[%s0 + $0x70] sm:$0xff]
    %v71 = vld [vmem:[%s0 + $0x78] sm:$0xff]
    %v72 = vpack.c.bf16 %v57, %v56
    %v73 = vpack.c.bf16 %v59, %v58
    %v74 = vpack.c.bf16 %v61, %v60
    %v75 = vpack.c.bf16 %v63, %v62
    %v76 = vpack.c.bf16 %v65, %v64
    %v77 = vpack.c.bf16 %v67, %v66
    %v78 = vpack.c.bf16 %v69, %v68
    %v79 = vpack.c.bf16 %v71, %v70
    %v80 = vld [vmem:[#allocation2] sm:$0xf]
    %v81 = vld [vmem:[#allocation2 + $0x4] sm:$0xf]
    %v82 = vld [vmem:[#allocation2 + $0x8] sm:$0xf]
    %v83 = vld [vmem:[#allocation2 + $0xc] sm:$0xf]
    %v84 = vld [vmem:[%s2] sm:$0x1]
    %v86 = vlaneseq
    %v87 = vshrl.u32 %v86, 7
    %v88 = vsub.s32 0, %v87
    %v89 = vrot.slane %v84, %v88
    %v95 = vunpack.c.l.b16 %v80
    %v96 = vunpack.c.l.b16 %v81
    %v97 = vunpack.c.l.b16 %v82
    %v98 = vunpack.c.l.b16 %v83
    %v99 = vpack.c.b16 %v96, %v95
    %v100 = vpack.c.b16 %v98, %v97
    %vm103 = vcmask 261120
    %v105 = vsel %vm103, %v72, 0
    %v108 = vsel %vm103, %v73, 0
    %v111 = vsel %vm103, %v74, 0
    %v114 = vsel %vm103, %v75, 0
    %v117 = vsel %vm103, %v76, 0
    %v120 = vsel %vm103, %v77, 0
    %v123 = vsel %vm103, %v78, 0
    %v126 = vsel %vm103, %v79, 0
    %128 = vmatprep.subr.bf16.mxu0 0
    %129 = vmatpush1.bf16.msra.mxu0 %v99
    %130 = vmatprep.subr.bf16.mxu0 0
    %131 = vmatpush1.bf16.msra.mxu0 %v100
    %132 = vmatprep.subr.bf16.mxu0 0
    %133 = vmatpush1.bf16.msra.mxu0 0
    %134 = vmatprep.subr.bf16.mxu0 0
    %135 = vmatpush1.bf16.msra.mxu0 0
    %136 = vmatprep.subr.bf16.mxu0 0
    %137 = vmatpush1.bf16.msra.mxu0 0
    %138 = vmatprep.subr.bf16.mxu0 0
    %139 = vmatpush1.bf16.msra.mxu0 0
    %140 = vmatprep.subr.bf16.mxu0 0
    %141 = vmatpush1.bf16.msra.mxu0 0
    %142 = vmatprep.subr.bf16.mxu0 0
    %143 = vmatpush1.bf16.msra.mxu0 0
    %144 = vmatprep.subr.bf16.mxu0 0
    %145 = vmatpush1.bf16.msra.mxu0 0
    %146 = vmatprep.subr.bf16.mxu0 0
    %147 = vmatpush1.bf16.msra.mxu0 0
    %148 = vmatprep.subr.bf16.mxu0 0
    %149 = vmatpush1.bf16.msra.mxu0 0
    %150 = vmatprep.subr.bf16.mxu0 0
    %151 = vmatpush1.bf16.msra.mxu0 0
    %152 = vmatprep.subr.bf16.mxu0 0
    %153 = vmatpush1.bf16.msra.mxu0 0
    %154 = vmatprep.subr.bf16.mxu0 0
    %155 = vmatpush1.bf16.msra.mxu0 0
    %156 = vmatprep.subr.bf16.mxu0 0
    %157 = vmatpush1.bf16.msra.mxu0 0
    %158 = vmatprep.subr.bf16.mxu0 0
    %159 = vmatpush1.bf16.msra.mxu0 0
    %160 = vmatprep.mubr.bf16.mxu0 0
    %161 = vmatmul.mubr.bf16.gmra.mrb[0].mxu0 %v105
    %v162 = vpop.f32.mrb[0].mxu0
    %v163 = vadd.f32 %v89, %v162
    %v164 = vpop.f32.mrb[0].mxu0
    %v165 = vpop.f32.mrb[0].mxu0
    %v166 = vadd.f32 %v89, %v165
    %v167 = vpop.f32.mrb[0].mxu0
    %168 = vmatprep.mubr.bf16.mxu0 0
    %169 = vmatmul.mubr.bf16.gmra.mrb[0].mxu0 %v108
    %v170 = vpop.f32.mrb[0].mxu0
    %v171 = vadd.f32 %v89, %v170
    %v172 = vpop.f32.mrb[0].mxu0
    %v173 = vpop.f32.mrb[0].mxu0
    %v174 = vadd.f32 %v89, %v173
    %v175 = vpop.f32.mrb[0].mxu0
    %176 = vmatprep.mubr.bf16.mxu0 0
    %177 = vmatmul.mubr.bf16.gmra.mrb[0].mxu0 %v111
    %v178 = vpop.f32.mrb[0].mxu0
    %v179 = vadd.f32 %v89, %v178
    %v180 = vpop.f32.mrb[0].mxu0
    %v181 = vpop.f32.mrb[0].mxu0
    %v182 = vadd.f32 %v89, %v181
    %v183 = vpop.f32.mrb[0].mxu0
    %184 = vmatprep.mubr.bf16.mxu0 0
    %185 = vmatmul.mubr.bf16.gmra.mrb[0].mxu0 %v114
    %v186 = vpop.f32.mrb[0].mxu0
    %v187 = vadd.f32 %v89, %v186
    %v188 = vpop.f32.mrb[0].mxu0
    %v189 = vpop.f32.mrb[0].mxu0
    %v190 = vadd.f32 %v89, %v189
    %v191 = vpop.f32.mrb[0].mxu0
    %192 = vmatprep.mubr.bf16.mxu0 0
    %193 = vmatmul.mubr.bf16.gmra.mrb[0].mxu0 %v117
    %v194 = vpop.f32.mrb[0].mxu0
    %v195 = vadd.f32 %v89, %v194
    %v196 = vpop.f32.mrb[0].mxu0
    %v197 = vpop.f32.mrb[0].mxu0
    %v198 = vadd.f32 %v89, %v197
    %v199 = vpop.f32.mrb[0].mxu0
    %200 = vmatprep.mubr.bf16.mxu0 0
    %201 = vmatmul.mubr.bf16.gmra.mrb[0].mxu0 %v120
    %v202 = vpop.f32.mrb[0].mxu0
    %v203 = vadd.f32 %v89, %v202
    %v204 = vpop.f32.mrb[0].mxu0
    %v205 = vpop.f32.mrb[0].mxu0
    %v206 = vadd.f32 %v89, %v205
    %v207 = vpop.f32.mrb[0].mxu0
    %208 = vmatprep.mubr.bf16.mxu0 0
    %209 = vmatmul.mubr.bf16.gmra.mrb[0].mxu0 %v123
    %v210 = vpop.f32.mrb[0].mxu0
    %v211 = vadd.f32 %v89, %v210
    %v212 = vpop.f32.mrb[0].mxu0
    %v213 = vpop.f32.mrb[0].mxu0
    %v214 = vadd.f32 %v89, %v213
    %v215 = vpop.f32.mrb[0].mxu0
    %216 = vmatprep.mubr.bf16.mxu0 0
    %217 = vmatmul.mubr.bf16.gmra.mrb[0].mxu0 %v126
    %v218 = vpop.f32.mrb[0].mxu0
    %v219 = vadd.f32 %v89, %v218
    %v220 = vpop.f32.mrb[0].mxu0
    %v221 = vpop.f32.mrb[0].mxu0
    %v222 = vadd.f32 %v89, %v221
    %v223 = vpop.f32.mrb[0].mxu0
    %224 = vdwg.mxu0
    %v225 = vmax.f32 %v163, 0.0
    %v226 = vmax.f32 %v166, 0.0
    %v227 = vmax.f32 %v171, 0.0
    %v228 = vmax.f32 %v174, 0.0
    %v229 = vmax.f32 %v179, 0.0
    %v230 = vmax.f32 %v182, 0.0
    %v231 = vmax.f32 %v187, 0.0
    %v232 = vmax.f32 %v190, 0.0
    %v233 = vmax.f32 %v195, 0.0
    %v234 = vmax.f32 %v198, 0.0
    %v235 = vmax.f32 %v203, 0.0
    %v236 = vmax.f32 %v206, 0.0
    %v237 = vmax.f32 %v211, 0.0
    %v238 = vmax.f32 %v214, 0.0
    %v239 = vmax.f32 %v219, 0.0
    %v240 = vmax.f32 %v222, 0.0
    %v241 = vpack.c.bf16 %v226, %v225
    %v242 = vpack.c.bf16 %v228, %v227
    %v243 = vpack.c.bf16 %v230, %v229
    %v244 = vpack.c.bf16 %v232, %v231
    %v245 = vpack.c.bf16 %v234, %v233
    %v246 = vpack.c.bf16 %v236, %v235
    %v247 = vpack.c.bf16 %v238, %v237
    %v248 = vpack.c.bf16 %v240, %v239
    %v249 = vld [vmem:[#allocation5] sm:$0xf]
    %v250 = vld [vmem:[#allocation5 + $0x4] sm:$0xf]
    %v251 = vld [vmem:[#allocation5 + $0x8] sm:$0xf]
    %v252 = vld [vmem:[#allocation5 + $0xc] sm:$0xf]
    %v253 = vld [vmem:[#allocation5 + $0x10] sm:$0xf]
    %v254 = vld [vmem:[#allocation5 + $0x14] sm:$0xf]
    %v255 = vld [vmem:[#allocation5 + $0x18] sm:$0xf]
    %v256 = vld [vmem:[#allocation5 + $0x1c] sm:$0xf]
    %v257 = vld [vmem:[#allocation5 + $0x20] sm:$0xf]
    %v258 = vld [vmem:[#allocation5 + $0x24] sm:$0xf]
    %v259 = vld [vmem:[#allocation5 + $0x28] sm:$0xf]
    %v260 = vld [vmem:[#allocation5 + $0x2c] sm:$0xf]
    %v261 = vld [vmem:[#allocation5 + $0x30] sm:$0xf]
    %v262 = vld [vmem:[#allocation5 + $0x34] sm:$0xf]
    %v263 = vld [vmem:[#allocation5 + $0x38] sm:$0xf]
    %v264 = vld [vmem:[#allocation5 + $0x3c] sm:$0xf]
    %v265 = vld [vmem:[%s4] sm:$0x1]
    %v267 = vlaneseq
    %v268 = vshrl.u32 %v267, 7
    %v269 = vsub.s32 0, %v268
    %v270 = vrot.slane %v265, %v269
    %v288 = vunpack.c.l.b16 %v249
    %v289 = vunpack.c.l.b16 %v250
    %v290 = vunpack.c.l.b16 %v251
    %v291 = vunpack.c.l.b16 %v252
    %v292 = vunpack.c.l.b16 %v253
    %v293 = vunpack.c.l.b16 %v254
    %v294 = vunpack.c.l.b16 %v255
    %v295 = vunpack.c.l.b16 %v256
    %v296 = vunpack.c.l.b16 %v257
    %v297 = vunpack.c.l.b16 %v258
    %v298 = vunpack.c.l.b16 %v259
    %v299 = vunpack.c.l.b16 %v260
    %v300 = vunpack.c.l.b16 %v261
    %v301 = vunpack.c.l.b16 %v262
    %v302 = vunpack.c.l.b16 %v263
    %v303 = vunpack.c.l.b16 %v264
    %v304 = vpack.c.b16 %v289, %v288
    %v305 = vpack.c.b16 %v291, %v290
    %v306 = vpack.c.b16 %v293, %v292
    %v307 = vpack.c.b16 %v295, %v294
    %v308 = vpack.c.b16 %v297, %v296
    %v309 = vpack.c.b16 %v299, %v298
    %v310 = vpack.c.b16 %v301, %v300
    %v311 = vpack.c.b16 %v303, %v302
    %320 = vmatprep.subr.bf16.mxu0 0
    %321 = vmatpush1.bf16.msra.mxu0 %v304
    %322 = vmatprep.subr.bf16.mxu0 0
    %323 = vmatpush1.bf16.msra.mxu0 %v305
    %324 = vmatprep.subr.bf16.mxu0 0
    %325 = vmatpush1.bf16.msra.mxu0 %v306
    %326 = vmatprep.subr.bf16.mxu0 0
    %327 = vmatpush1.bf16.msra.mxu0 %v307
    %328 = vmatprep.subr.bf16.mxu0 0
    %329 = vmatpush1.bf16.msra.mxu0 %v308
    %330 = vmatprep.subr.bf16.mxu0 0
    %331 = vmatpush1.bf16.msra.mxu0 %v309
    %332 = vmatprep.subr.bf16.mxu0 0
    %333 = vmatpush1.bf16.msra.mxu0 %v310
    %334 = vmatprep.subr.bf16.mxu0 0
    %335 = vmatpush1.bf16.msra.mxu0 %v311
    %336 = vmatprep.subr.bf16.mxu0 0
    %337 = vmatpush1.bf16.msra.mxu0 0
    %338 = vmatprep.subr.bf16.mxu0 0
    %339 = vmatpush1.bf16.msra.mxu0 0
    %340 = vmatprep.subr.bf16.mxu0 0
    %341 = vmatpush1.bf16.msra.mxu0 0
    %342 = vmatprep.subr.bf16.mxu0 0
    %343 = vmatpush1.bf16.msra.mxu0 0
    %344 = vmatprep.subr.bf16.mxu0 0
    %345 = vmatpush1.bf16.msra.mxu0 0
    %346 = vmatprep.subr.bf16.mxu0 0
    %347 = vmatpush1.bf16.msra.mxu0 0
    %348 = vmatprep.subr.bf16.mxu0 0
    %349 = vmatpush1.bf16.msra.mxu0 0
    %350 = vmatprep.subr.bf16.mxu0 0
    %351 = vmatpush1.bf16.msra.mxu0 0
    %352 = vmatprep.mubr.bf16.mxu0 0
    %353 = vmatmul.mubr.bf16.gmra.mrb[0].mxu0 %v241
    %v354 = vpop.f32.mrb[0].mxu0
    %v355 = vadd.f32 %v270, %v354
    %v356 = vpop.f32.mrb[0].mxu0
    %v357 = vpop.f32.mrb[0].mxu0
    %v358 = vadd.f32 %v270, %v357
    %v359 = vpop.f32.mrb[0].mxu0
    %360 = vmatprep.mubr.bf16.mxu0 0
    %361 = vmatmul.mubr.bf16.gmra.mrb[0].mxu0 %v242
    %v362 = vpop.f32.mrb[0].mxu0
    %v363 = vadd.f32 %v270, %v362
    %v364 = vpop.f32.mrb[0].mxu0
    %v365 = vpop.f32.mrb[0].mxu0
    %v366 = vadd.f32 %v270, %v365
    %v367 = vpop.f32.mrb[0].mxu0
    %368 = vmatprep.mubr.bf16.mxu0 0
    %369 = vmatmul.mubr.bf16.gmra.mrb[0].mxu0 %v243
    %v370 = vpop.f32.mrb[0].mxu0
    %v371 = vadd.f32 %v270, %v370
    %v372 = vpop.f32.mrb[0].mxu0
    %v373 = vpop.f32.mrb[0].mxu0
    %v374 = vadd.f32 %v270, %v373
    %v375 = vpop.f32.mrb[0].mxu0
    %376 = vmatprep.mubr.bf16.mxu0 0
    %377 = vmatmul.mubr.bf16.gmra.mrb[0].mxu0 %v244
    %v378 = vpop.f32.mrb[0].mxu0
    %v379 = vadd.f32 %v270, %v378
    %v380 = vpop.f32.mrb[0].mxu0
    %v381 = vpop.f32.mrb[0].mxu0
    %v382 = vadd.f32 %v270, %v381
    %v383 = vpop.f32.mrb[0].mxu0
    %384 = vmatprep.mubr.bf16.mxu0 0
    %385 = vmatmul.mubr.bf16.gmra.mrb[0].mxu0 %v245
    %v386 = vpop.f32.mrb[0].mxu0
    %v387 = vadd.f32 %v270, %v386
    %v388 = vpop.f32.mrb[0].mxu0
    %v389 = vpop.f32.mrb[0].mxu0
    %v390 = vadd.f32 %v270, %v389
    %v391 = vpop.f32.mrb[0].mxu0
    %392 = vmatprep.mubr.bf16.mxu0 0
    %393 = vmatmul.mubr.bf16.gmra.mrb[0].mxu0 %v246
    %v394 = vpop.f32.mrb[0].mxu0
    %v395 = vadd.f32 %v270, %v394
    %v396 = vpop.f32.mrb[0].mxu0
    %v397 = vpop.f32.mrb[0].mxu0
    %v398 = vadd.f32 %v270, %v397
    %v399 = vpop.f32.mrb[0].mxu0
    %400 = vmatprep.mubr.bf16.mxu0 0
    %401 = vmatmul.mubr.bf16.gmra.mrb[0].mxu0 %v247
    %v402 = vpop.f32.mrb[0].mxu0
    %v403 = vadd.f32 %v270, %v402
    %v404 = vpop.f32.mrb[0].mxu0
    %v405 = vpop.f32.mrb[0].mxu0
    %v406 = vadd.f32 %v270, %v405
    %v407 = vpop.f32.mrb[0].mxu0
    %408 = vmatprep.mubr.bf16.mxu0 0
    %409 = vmatmul.mubr.bf16.gmra.mrb[0].mxu0 %v248
    %v410 = vpop.f32.mrb[0].mxu0
    %v411 = vadd.f32 %v270, %v410
    %v412 = vpop.f32.mrb[0].mxu0
    %v413 = vpop.f32.mrb[0].mxu0
    %v414 = vadd.f32 %v270, %v413
    %v415 = vpop.f32.mrb[0].mxu0
    %416 = vdwg.mxu0
    %v417 = vmax.f32 %v355, 0.0
    %v418 = vmax.f32 %v358, 0.0
    %v419 = vmax.f32 %v363, 0.0
    %v420 = vmax.f32 %v366, 0.0
    %v421 = vmax.f32 %v371, 0.0
    %v422 = vmax.f32 %v374, 0.0
    %v423 = vmax.f32 %v379, 0.0
    %v424 = vmax.f32 %v382, 0.0
    %v425 = vmax.f32 %v387, 0.0
    %v426 = vmax.f32 %v390, 0.0
    %v427 = vmax.f32 %v395, 0.0
    %v428 = vmax.f32 %v398, 0.0
    %v429 = vmax.f32 %v403, 0.0
    %v430 = vmax.f32 %v406, 0.0
    %v431 = vmax.f32 %v411, 0.0
    %v432 = vmax.f32 %v414, 0.0
    %v433 = vpack.c.bf16 %v418, %v417
    %v434 = vpack.c.bf16 %v420, %v419
    %v435 = vpack.c.bf16 %v422, %v421
    %v436 = vpack.c.bf16 %v424, %v423
    %v437 = vpack.c.bf16 %v426, %v425
    %v438 = vpack.c.bf16 %v428, %v427
    %v439 = vpack.c.bf16 %v430, %v429
    %v440 = vpack.c.bf16 %v432, %v431
    %v441 = vld [vmem:[%s5] sm:$0xf]
    %v442 = vld [vmem:[%s6] sm:$0xff]
    %444 = vset.pattern.permute.xlu0 0
    %445 = vperm.xlu0 %444, %v442
    %v446 = vpop.permute.xlu0 %445
    %448 = vmatprep.subr.bf16.mxu0 0
    %449 = vmatpush1.bf16.xpose.msra.mxu0 %v433
    %450 = vmatprep.subr.bf16.mxu0 0
    %451 = vmatpush1.bf16.xpose.msra.mxu0 %v434
    %452 = vmatprep.subr.bf16.mxu0 0
    %453 = vmatpush1.bf16.xpose.msra.mxu0 %v435
    %454 = vmatprep.subr.bf16.mxu0 0
    %455 = vmatpush1.bf16.xpose.msra.mxu0 %v436
    %456 = vmatprep.subr.bf16.mxu0 0
    %457 = vmatpush1.bf16.xpose.msra.mxu0 %v437
    %458 = vmatprep.subr.bf16.mxu0 0
    %459 = vmatpush1.bf16.xpose.msra.mxu0 %v438
    %460 = vmatprep.subr.bf16.mxu0 0
    %461 = vmatpush1.bf16.xpose.msra.mxu0 %v439
    %462 = vmatprep.subr.bf16.mxu0 0
    %463 = vmatpush1.bf16.xpose.msra.mxu0 %v440
    %464 = vmatprep.subr.bf16.mxu0 0
    %465 = vmatpush1.bf16.xpose.msra.mxu0 0
    %466 = vmatprep.subr.bf16.mxu0 0
    %467 = vmatpush1.bf16.xpose.msra.mxu0 0
    %468 = vmatprep.subr.bf16.mxu0 0
    %469 = vmatpush1.bf16.xpose.msra.mxu0 0
    %470 = vmatprep.subr.bf16.mxu0 0
    %471 = vmatpush1.bf16.xpose.msra.mxu0 0
    %472 = vmatprep.subr.bf16.mxu0 0
    %473 = vmatpush1.bf16.xpose.msra.mxu0 0
    %474 = vmatprep.subr.bf16.mxu0 0
    %475 = vmatpush1.bf16.xpose.msra.mxu0 0
    %476 = vmatprep.subr.bf16.mxu0 0
    %477 = vmatpush1.bf16.xpose.msra.mxu0 0
    %478 = vmatprep.subr.bf16.mxu0 0
    %479 = vmatpush1.bf16.xpose.msra.mxu0 0
    %480 = vmatprep.mubr.bf16.mxu0 0
    %481 = vmatmul.mubr.bf16.gmra.mrb[0].mxu0 %v441
    %v482 = vpop.f32.mrb[0].mxu0
    %v483 = vadd.f32 %v446, %v482
    %v484 = vpop.f32.mrb[0].mxu0
    %v485 = vpop.f32.mrb[0].mxu0
    %v486 = vpop.f32.mrb[0].mxu0
    %487 = vdwg.mxu0
    %488 = vst [vmem:[#allocation7] sm:$0x1] %v483
    // Predicated region
    $region38: #{tpu_custom_call.1} parent=1 // pred_check
      _
    $region39: #{tpu_custom_call.1} parent=1 // pred_check_branch
      %490 = sbr.rel (0) target = $region41
    $region40: #{tpu_custom_call.1} parent=1 // pred_region
      %s492 = ssub.s32 16, 16
      %493 = vsyncadd [#allocation4], %s492
      %s495 = sshll.u32 [#allocation7], 4
      %s496 = int_to_ptr.vmem [resolvable:$true] %s495
      %498 = dma.vmem_to_hbm [thread:$0]  %s496, 16, %s7, [#allocation4]
    $region41: #{tpu_custom_call.1} parent=1 // pred_fallthru
      _
    // Predicated region
    $region42: #{tpu_custom_call.1} parent=1 // pred_check
      _
    $region43: #{tpu_custom_call.1} parent=1 // pred_check_branch
      %500 = sbr.rel (0) target = $region45
    $region44: #{tpu_custom_call.1} parent=1 // pred_region
      %501 = dma.done [#allocation4], 16
    $region45: #{tpu_custom_call.1} parent=1 // pred_fallthru
      _
    %502 = vsyncpa [#allocation3], 1
    %503 = vsyncpa [#allocation6], 1
    %504 = vsyncpa [#allocation4], 1

</llo_original>
